<compile_context>
chip_gen: v6e
topology: v6e:2x2x1
jax: 0.10.0
libtpu: 0.0.40
codegen_flags: <defaults>
</compile_context>

<pallas_src>
import math

import jax
import jax.numpy as jnp
from jax.experimental import pallas as pl
from jax.experimental.pallas import tpu as pltpu


# ----------------------------------------------------------------------------
# One-time kernel: row-wise L2 normalization of the cached pair embeddings.
# Matches F.normalize(..., dim=-1, p=2) semantics: x / max(||x||, 1e-12).
# ----------------------------------------------------------------------------
def _l2norm_rows_kernel(x_ref, o_ref):
    x = x_ref[...].astype(jnp.float32)
    ss = jnp.sum(x * x, axis=-1, keepdims=True)
    inv = jax.lax.rsqrt(jnp.maximum(ss, 1e-24))  # == 1 / max(||x||, 1e-12)
    o_ref[...] = (x * inv).astype(o_ref.dtype)


def l2_normalize_rows(x):
    P, D = x.shape
    return pl.pallas_call(
        _l2norm_rows_kernel,
        out_shape=jax.ShapeDtypeStruct((P, D), jnp.float32),
        grid=(1,),
        in_specs=[pl.BlockSpec((P, D), lambda i: (0, 0))],
        out_specs=pl.BlockSpec((P, D), lambda i: (0, 0)),
        compiler_params=pltpu.CompilerParams(dimension_semantics=("arbitrary",)),
    )(x)


# ----------------------------------------------------------------------------
# Fused eval-forward kernel:
#   feats  = x @ W                      (bf16 MXU matmul, f32 accumulation)
#   inv_n  = rsqrt(max(sum(feats^2), eps^2))          (EUP)
#   score  = (feats @ pair_n^T) * inv_n  (dot_general, rhs contracted on dim 1)
# pair_n is already L2-normalized, so this equals
#   normalize(feats) @ normalize(pair_embeds).T
# ----------------------------------------------------------------------------
def _clip_score_kernel(x_ref, w_ref, pairn_ref, o_ref):
    feats = jnp.dot(x_ref[...], w_ref[...], preferred_element_type=jnp.float32)

    ss = jnp.sum(feats * feats, axis=-1, keepdims=True)
    inv_norm = jax.lax.rsqrt(jnp.maximum(ss, 1e-24))

    # feats [Bp, D] . pair_n [P, D] contracted on D -> [Bp, P]; no transpose.
    score = jax.lax.dot_general(
        feats,
        pairn_ref[...],
        dimension_numbers=(((1,), (1,)), ((), ())),
        preferred_element_type=jnp.float32,
    )
    o_ref[...] = (score * inv_norm).astype(o_ref.dtype)


def plain_clip_scores(x_flat_bf16, w_bf16, pair_n):
    Bp, K = x_flat_bf16.shape
    K2, D = w_bf16.shape
    P, D2 = pair_n.shape
    assert K == K2 and D == D2 and Bp % 8 == 0
    return pl.pallas_call(
        _clip_score_kernel,
        out_shape=jax.ShapeDtypeStruct((Bp, P), jnp.float32),
        grid=(1,),
        in_specs=[
            pl.BlockSpec((Bp, K), lambda i: (0, 0)),
            pl.BlockSpec((K, D), lambda i: (0, 0)),
            pl.BlockSpec((P, D), lambda i: (0, 0)),
        ],
        out_specs=pl.BlockSpec((Bp, P), lambda i: (0, 0)),
        compiler_params=pltpu.CompilerParams(dimension_semantics=("arbitrary",)),
    )(x_flat_bf16, w_bf16, pair_n)


# ----------------------------------------------------------------------------
# PlainClip eval-mode forward (returns (None, scores) like the PyTorch module).
# ----------------------------------------------------------------------------
class PlainClipPallas:
    def __init__(self, key, *, num_pairs=128, embed_dim=128, img_flat_dim=3 * 32 * 32):
        k1, k2 = jax.random.split(key, 2)
        # proxy for the CLIP vision encoder: a single linear projection
        self.img_proj = (
            jax.random.normal(k1, (img_flat_dim, embed_dim), jnp.float32)
            / math.sqrt(img_flat_dim)
        )
        # bf16 copy used on the MXU fast path (f32 accumulation in-kernel)
        self.img_proj_bf16 = self.img_proj.astype(jnp.bfloat16)
        # proxy for the precomputed / cached pair text embeddings
        # (self.saved_pair_embeds in the PyTorch module)
        self.pair_embeds = jax.random.normal(k2, (num_pairs, embed_dim), jnp.float32)
        # cached constant -> normalize ONCE here instead of every forward
        self.pair_embeds_n = l2_normalize_rows(self.pair_embeds)
        # logit scale exists on the module but is NOT applied in the eval branch
        self.logit_scale = jnp.asarray(math.log(1.0 / 0.07), jnp.float32)

    def forward(self, img_nchw):
        B = img_nchw.shape[0]
        img_flat = img_nchw.reshape(B, -1).astype(jnp.float32)  # glue reshape (NCHW -> [B, C*H*W])
        # pad batch to a multiple of 8 sublanes so output stores are unmasked
        Bp = ((B + 7) // 8) * 8
        if Bp != B:
            img_flat = jnp.pad(img_flat, ((0, Bp - B), (0, 0)))
        scores = plain_clip_scores(
            img_flat.astype(jnp.bfloat16), self.img_proj_bf16, self.pair_embeds_n
        )
        return None, scores[:B]


# ----------------------------------------------------------------------------
# Pure-JAX f32 reference (mirrors the PyTorch eval branch).
# ----------------------------------------------------------------------------
def _reference(img_nchw, img_proj, pair_embeds):
    B = img_nchw.shape[0]
    x = img_nchw.reshape(B, -1).astype(jnp.float32) @ img_proj
    xn = x / jnp.maximum(jnp.linalg.norm(x, axis=-1, keepdims=True), 1e-12)
    pn = pair_embeds / jnp.maximum(
        jnp.linalg.norm(pair_embeds, axis=-1, keepdims=True), 1e-12
    )
    return xn @ pn.T


if __name__ == "__main__":
    key = jax.random.PRNGKey(0)
    k_img, k_model = jax.random.split(key)

    B, C, H, W = 4, 3, 32, 32
    img = jax.random.normal(k_img, (B, C, H, W), jnp.float32)  # NCHW, like PyTorch

    model = PlainClipPallas(
        k_model, num_pairs=128, embed_dim=128, img_flat_dim=C * H * W
    )

    _, scores = model.forward(img)
    scores = jax.block_until_ready(scores)

    ref = _reference(img, model.img_proj, model.pair_embeds)
    assert scores.shape == (B, 128)
    # bf16 projection operands -> relaxed tolerance vs the f32 reference
    assert jnp.allclose(scores, ref, atol=2e-2, rtol=2e-2), "mismatch vs reference"

    print("KERNEL_OK")
</pallas_src>

<mosaic_0001>
module attributes {stable_mosaic.version = 11 : i64} {
  func.func @_l2norm_rows_kernel(%arg0: i32, %arg1: memref<128x128xf32, #tpu.memory_space<vmem>>, %arg2: memref<128x128xf32, #tpu.memory_space<vmem>>) attributes {dimension_semantics = [#tpu.dimension_semantics<arbitrary>], iteration_bounds = array<i64: 1>, scalar_prefetch = 0 : i64, scratch_operands = 0 : i64, tpu.core_type = #tpu.core_type<tc>, window_params = [{pipeline_mode = #tpu.pipeline_mode<synchronous>, transform_indices = @transform_0, window_bounds = array<i64: 128, 128>}, {pipeline_mode = #tpu.pipeline_mode<synchronous>, transform_indices = @transform_1, window_bounds = array<i64: 128, 128>}]} {
    %c0 = arith.constant 0 : index
    %c0_0 = arith.constant 0 : index
    %0 = vector.load %arg1[%c0, %c0_0] : memref<128x128xf32, #tpu.memory_space<vmem>>, vector<128x128xf32>
    %1 = arith.mulf %0, %0 : vector<128x128xf32>
    %cst = arith.constant dense<0.000000e+00> : vector<128xf32>
    %2 = vector.multi_reduction <add>, %1, %cst [1] : vector<128x128xf32> to vector<128xf32>
    %3 = vector.shape_cast %2 : vector<128xf32> to vector<128x1xf32>
    %cst_1 = arith.constant 1.000000e-24 : f32
    %4 = vector.broadcast %cst_1 : f32 to vector<128x1xf32>
    %5 = arith.maximumf %3, %4 : vector<128x1xf32>
    %6 = math.rsqrt %5 : vector<128x1xf32>
    %7 = vector.broadcast %6 : vector<128x1xf32> to vector<128x128xf32>
    %8 = arith.mulf %0, %7 : vector<128x128xf32>
    %c0_2 = arith.constant 0 : index
    %c0_3 = arith.constant 0 : index
    %9 = vector.load %arg2[%c0_2, %c0_3] : memref<128x128xf32, #tpu.memory_space<vmem>>, vector<128x128xf32>
    tpu.vector_store %arg2[%c0_2, %c0_3], %8 {strides = array<i32>} : memref<128x128xf32, #tpu.memory_space<vmem>>, vector<128x128xf32>,
    return
  }
  func.func @transform_0(%arg0: i32) -> (i32, i32) {
    %c0_i32 = arith.constant 0 : i32
    %c0_i32_0 = arith.constant 0 : i32
    %c0_i32_1 = arith.constant 0 : i32
    return %c0_i32, %c0_i32_0 : i32, i32
  }
  func.func @transform_1(%arg0: i32) -> (i32, i32) {
    %c0_i32 = arith.constant 0 : i32
    %c0_i32_0 = arith.constant 0 : i32
    %c0_i32_1 = arith.constant 0 : i32
    return %c0_i32, %c0_i32_0 : i32, i32
  }
}

</mosaic_0001>

<llo_original>
// kernel: tpu_custom_call.1
$region0: #{tpu_custom_call.1}
  #allocation0 [shape = 'u32[]', space=smem, size = 0x4, offset = 0x4, fixed_abs, tag = 'smem constant byte address 0x4 - core index']
  #allocation1 [shape = 'u32[144,128]{1,0:T(1,128)}', space=vmem, size = 0x12000, scoped, tag = 'internal scratch']
  %s0 = inlined_call_operand.hbm [shape: f32[128,128], index: 0, kind: input, shape index: {}]
  %s1 = inlined_call_operand.hbm [shape: f32[128,128], index: 1, kind: output, shape index: {}]
  %s2 = sld [smem:[#allocation0]]
  $region18: #{tpu_custom_call.1} parent=0
    _
  %s4 = ssub.s32 1, %s2
  %s5 = scalar_select 0, %s4, %s2
  $region1: #{tpu_custom_call.1} parent=0
    #allocation2 [shape = 'u8[65536]{0}', space=vmem, size = 0x10000, scoped, tag = 'input window, operand 0, single buffered']
    #allocation3 [shape = 's32[1]{0}', space=sflag, size = 0x4, scoped, tag = 'scoped memory for tpu_custom_call.1']
    #allocation4 [shape = 's32[1]{0}', space=sflag, size = 0x4, scoped, tag = 'scoped memory for tpu_custom_call.1']
    #allocation5 [shape = 'u8[65536]{0}', space=vmem, size = 0x10000, scoped, tag = 'output window, operand 0, single buffered']
    %6 = vsyncpa [#allocation3], 0
    %7 = vsyncpa [#allocation4], 0
    // Predicated region
    $region2: #{tpu_custom_call.1} parent=1 // pred_check
      _
    $region3: #{tpu_custom_call.1} parent=1 // pred_check_branch
      %9 = sbr.rel (0) target = $region5
    $region4: #{tpu_custom_call.1} parent=1 // pred_region
      %s11 = ssub.s32 2048, 2048
      %12 = vsyncadd [#allocation3], %s11
      %s13 = sshll.u32 [#allocation2], 4
      %s14 = int_to_ptr.vmem [resolvable:$true] %s13
      %19 = dma.hbm_to_vmem [thread:$0]  %s0, 2048, %s14, [#allocation3], 128, 128, 8
    $region5: #{tpu_custom_call.1} parent=1 // pred_fallthru
      _
    // Predicated region
    $region6: #{tpu_custom_call.1} parent=1 // pred_check
      _
    $region7: #{tpu_custom_call.1} parent=1 // pred_check_branch
      %21 = sbr.rel (0) target = $region9
    $region8: #{tpu_custom_call.1} parent=1 // pred_region
      %22 = dma.done [#allocation3], 2048
    $region9: #{tpu_custom_call.1} parent=1 // pred_fallthru
      _
    %v23 = vld [vmem:[#allocation2] sm:$0xff]
    %v24 = vld [vmem:[#allocation2 + $0x8] sm:$0xff]
    %v25 = vld [vmem:[#allocation2 + $0x10] sm:$0xff]
    %v26 = vld [vmem:[#allocation2 + $0x18] sm:$0xff]
    %v27 = vld [vmem:[#allocation2 + $0x20] sm:$0xff]
    %v28 = vld [vmem:[#allocation2 + $0x28] sm:$0xff]
    %v29 = vld [vmem:[#allocation2 + $0x30] sm:$0xff]
    %v30 = vld [vmem:[#allocation2 + $0x38] sm:$0xff]
    %v31 = vld [vmem:[#allocation2 + $0x40] sm:$0xff]
    %v32 = vld [vmem:[#allocation2 + $0x48] sm:$0xff]
    %v33 = vld [vmem:[#allocation2 + $0x50] sm:$0xff]
    %v34 = vld [vmem:[#allocation2 + $0x58] sm:$0xff]
    %v35 = vld [vmem:[#allocation2 + $0x60] sm:$0xff]
    %v36 = vld [vmem:[#allocation2 + $0x68] sm:$0xff]
    %v37 = vld [vmem:[#allocation2 + $0x70] sm:$0xff]
    %v38 = vld [vmem:[#allocation2 + $0x78] sm:$0xff]
    %v39 = vmul.f32 %v23, %v23
    %v40 = vmul.f32 %v24, %v24
    %v41 = vmul.f32 %v25, %v25
    %v42 = vmul.f32 %v26, %v26
    %v43 = vmul.f32 %v27, %v27
    %v44 = vmul.f32 %v28, %v28
    %v45 = vmul.f32 %v29, %v29
    %v46 = vmul.f32 %v30, %v30
    %v47 = vmul.f32 %v31, %v31
    %v48 = vmul.f32 %v32, %v32
    %v49 = vmul.f32 %v33, %v33
    %v50 = vmul.f32 %v34, %v34
    %v51 = vmul.f32 %v35, %v35
    %v52 = vmul.f32 %v36, %v36
    %v53 = vmul.f32 %v37, %v37
    %v54 = vmul.f32 %v38, %v38
    %55 = vadd.xlane.f32.xlu0 %v39
    %v56 = vpop.xlane.xlu0 %55
    %57 = vadd.xlane.f32.xlu0 %v40
    %v58 = vpop.xlane.xlu0 %57
    %59 = vadd.xlane.f32.xlu0 %v41
    %v60 = vpop.xlane.xlu0 %59
    %61 = vadd.xlane.f32.xlu0 %v42
    %v62 = vpop.xlane.xlu0 %61
    %63 = vadd.xlane.f32.xlu0 %v43
    %v64 = vpop.xlane.xlu0 %63
    %65 = vadd.xlane.f32.xlu0 %v44
    %v66 = vpop.xlane.xlu0 %65
    %67 = vadd.xlane.f32.xlu0 %v45
    %v68 = vpop.xlane.xlu0 %67
    %69 = vadd.xlane.f32.xlu0 %v46
    %v70 = vpop.xlane.xlu0 %69
    %71 = vadd.xlane.f32.xlu0 %v47
    %v72 = vpop.xlane.xlu0 %71
    %73 = vadd.xlane.f32.xlu0 %v48
    %v74 = vpop.xlane.xlu0 %73
    %75 = vadd.xlane.f32.xlu0 %v49
    %v76 = vpop.xlane.xlu0 %75
    %77 = vadd.xlane.f32.xlu0 %v50
    %v78 = vpop.xlane.xlu0 %77
    %79 = vadd.xlane.f32.xlu0 %v51
    %v80 = vpop.xlane.xlu0 %79
    %81 = vadd.xlane.f32.xlu0 %v52
    %v82 = vpop.xlane.xlu0 %81
    %83 = vadd.xlane.f32.xlu0 %v53
    %v84 = vpop.xlane.xlu0 %83
    %85 = vadd.xlane.f32.xlu0 %v54
    %v86 = vpop.xlane.xlu0 %85
    %v87 = vmax.f32 %v56, 1e-24
    %v88 = vmax.f32 %v58, 1e-24
    %v89 = vmax.f32 %v60, 1e-24
    %v90 = vmax.f32 %v62, 1e-24
    %v91 = vmax.f32 %v64, 1e-24
    %v92 = vmax.f32 %v66, 1e-24
    %v93 = vmax.f32 %v68, 1e-24
    %v94 = vmax.f32 %v70, 1e-24
    %v95 = vmax.f32 %v72, 1e-24
    %v96 = vmax.f32 %v74, 1e-24
    %v97 = vmax.f32 %v76, 1e-24
    %v98 = vmax.f32 %v78, 1e-24
    %v99 = vmax.f32 %v80, 1e-24
    %v100 = vmax.f32 %v82, 1e-24
    %v101 = vmax.f32 %v84, 1e-24
    %v102 = vmax.f32 %v86, 1e-24
    %v103 = vrsqrt.pop %v87
    %v104 = vrsqrt.pop %v88
    %v105 = vrsqrt.pop %v89
    %v106 = vrsqrt.pop %v90
    %v107 = vrsqrt.pop %v91
    %v108 = vrsqrt.pop %v92
    %v109 = vrsqrt.pop %v93
    %v110 = vrsqrt.pop %v94
    %v111 = vrsqrt.pop %v95
    %v112 = vrsqrt.pop %v96
    %v113 = vrsqrt.pop %v97
    %v114 = vrsqrt.pop %v98
    %v115 = vrsqrt.pop %v99
    %v116 = vrsqrt.pop %v100
    %v117 = vrsqrt.pop %v101
    %v118 = vrsqrt.pop %v102
    %v119 = vmul.f32 %v23, %v103
    %v120 = vmul.f32 %v24, %v104
    %v121 = vmul.f32 %v25, %v105
    %v122 = vmul.f32 %v26, %v106
    %v123 = vmul.f32 %v27, %v107
    %v124 = vmul.f32 %v28, %v108
    %v125 = vmul.f32 %v29, %v109
    %v126 = vmul.f32 %v30, %v110
    %v127 = vmul.f32 %v31, %v111
    %v128 = vmul.f32 %v32, %v112
    %v129 = vmul.f32 %v33, %v113
    %v130 = vmul.f32 %v34, %v114
    %v131 = vmul.f32 %v35, %v115
    %v132 = vmul.f32 %v36, %v116
    %v133 = vmul.f32 %v37, %v117
    %v134 = vmul.f32 %v38, %v118
    %135 = vst [vmem:[#allocation5] sm:$0xff] %v119
    %136 = vst [vmem:[#allocation5 + $0x8] sm:$0xff] %v120
    %137 = vst [vmem:[#allocation5 + $0x10] sm:$0xff] %v121
    %138 = vst [vmem:[#allocation5 + $0x18] sm:$0xff] %v122
    %139 = vst [vmem:[#allocation5 + $0x20] sm:$0xff] %v123
    %140 = vst [vmem:[#allocation5 + $0x28] sm:$0xff] %v124
    %141 = vst [vmem:[#allocation5 + $0x30] sm:$0xff] %v125
    %142 = vst [vmem:[#allocation5 + $0x38] sm:$0xff] %v126
    %143 = vst [vmem:[#allocation5 + $0x40] sm:$0xff] %v127
    %144 = vst [vmem:[#allocation5 + $0x48] sm:$0xff] %v128
    %145 = vst [vmem:[#allocation5 + $0x50] sm:$0xff] %v129
    %146 = vst [vmem:[#allocation5 + $0x58] sm:$0xff] %v130
    %147 = vst [vmem:[#allocation5 + $0x60] sm:$0xff] %v131
    %148 = vst [vmem:[#allocation5 + $0x68] sm:$0xff] %v132
    %149 = vst [vmem:[#allocation5 + $0x70] sm:$0xff] %v133
    %150 = vst [vmem:[#allocation5 + $0x78] sm:$0xff] %v134
    // Predicated region
    $region10: #{tpu_custom_call.1} parent=1 // pred_check
      _
    $region11: #{tpu_custom_call.1} parent=1 // pred_check_branch
      %152 = sbr.rel (0) target = $region13
    $region12: #{tpu_custom_call.1} parent=1 // pred_region
      %s154 = ssub.s32 2048, 2048
      %155 = vsyncadd [#allocation4], %s154
      %s156 = sshll.u32 [#allocation5], 4
      %s157 = int_to_ptr.vmem [resolvable:$true] %s156
      %162 = dma.vmem_to_hbm [thread:$0]  %s157, 2048, %s1, [#allocation4], 128, 128, 8
    $region13: #{tpu_custom_call.1} parent=1 // pred_fallthru
      _
    // Predicated region
    $region14: #{tpu_custom_call.1} parent=1 // pred_check
      _
    $region15: #{tpu_custom_call.1} parent=1 // pred_check_branch
      %164 = sbr.rel (0) target = $region17
    $region16: #{tpu_custom_call.1} parent=1 // pred_region
      %165 = dma.done [#allocation4], 2048
    $region17: #{tpu_custom_call.1} parent=1 // pred_fallthru
      _
    %166 = vsyncpa [#allocation3], 1
    %167 = vsyncpa [#allocation4], 1

</llo_original>
